<compile_context>
chip_gen: v7x
topology: tpu7x:2x2x1
jax: 0.10.0
libtpu: 0.0.40
codegen_flags: <defaults>
</compile_context>

<pallas_src>
import functools

import jax
import jax.numpy as jnp
from jax import lax
from jax.experimental import pallas as pl
from jax.experimental.pallas import tpu as pltpu


_MASK_NEG = -1.0e30   # additive mask for padded keys (finite -> exp underflows to 0, no NaN)
_M_INIT = -1.0e29     # running-max init; >> _MASK_NEG so even a fully padded kv tile gives p == 0


def _round_up(x, m):
    return (x + m - 1) // m * m


def _tpu_vmem_caps():
    """Returns (scoped-VMEM cap to request, K/V residency budget) per chip generation."""
    phys = 0
    try:
        info = pltpu.get_tpu_info()
        phys = int(getattr(info, "vmem_capacity_bytes", 0) or 0)
    except Exception:
        phys = 0
    if phys <= 0:
        phys = 64 * 1024 * 1024                      # conservative default (v7x-class)
    if phys >= 100 * 1024 * 1024:                    # v5e / v6e: 128 MiB physical VMEM
        return 96 * 1024 * 1024, 24 * 1024 * 1024
    return 48 * 1024 * 1024, 14 * 1024 * 1024        # v7x: 64 MiB physical, 32 MiB scoped default


def _vmem_limit(est_bytes, cap):
    # Always explicit (v5e's default scoped VMEM is only 16 MiB); generous margin, capped
    # below physical so the compiler keeps headroom for its own scratch.
    return int(min(cap, max(4 * est_bytes, 32 * 1024 * 1024)))


# ---------------------------------------------------------------------------
# Stage 1: fused QKV projection (1x1 conv == per-token linear), channel-major.
# ---------------------------------------------------------------------------
def _qkv_proj_kernel(x_ref, w_ref, b_ref, qkv_ref):
    # x_ref:   (1, cp, t)    input tokens, channel-major, input dtype (cast in-kernel)
    # w_ref:   (3cp, cp)     fused [q;k;v] weights in natural Conv2d (out, in) layout,
    #                        matmul dtype, softmax scale folded into the q rows
    # b_ref:   (3cp, 1)      fused bias, f32, scale folded into the q part
    # qkv_ref: (1, 3cp, t)   channel-major q/k/v slab, matmul dtype
    x = x_ref[0].astype(w_ref.dtype)                                     # (cp, t)
    acc = jnp.dot(w_ref[...], x, preferred_element_type=jnp.float32)     # (3cp, t) f32 accum
    qkv_ref[0] = (acc + b_ref[...]).astype(qkv_ref.dtype)


# ---------------------------------------------------------------------------
# Stage 2: flash-style global attention with online softmax (channel-major I/O).
# ---------------------------------------------------------------------------
def _flash_attn_kernel(q_ref, k_ref, v_ref, o_ref, qt_sc, m_sc, l_sc, acc_sc, *,
                       tk, n_real, out_c, mask_kv, kv_resident, approx_recip):
    ki = pl.program_id(2)

    @pl.when(ki == 0)
    def _init():
        # One aligned XLU transpose per query tile: channel-major Q -> token-major.
        qt_sc[...] = q_ref[0].astype(jnp.float32).T.astype(qt_sc.dtype)  # (tq, cp)
        m_sc[...] = jnp.full_like(m_sc, _M_INIT)
        l_sc[...] = jnp.zeros_like(l_sc)
        acc_sc[...] = jnp.zeros_like(acc_sc)

    if kv_resident:
        # K/V block covers the whole (padded) token axis and is fetched once per batch;
        # slice the current kv chunk out of the resident buffer (lane-aligned offset).
        off = pl.multiple_of(ki * tk, tk)
        k = k_ref[0, :, pl.ds(off, tk)]                                  # (cp, tk)
        v = v_ref[0, :, pl.ds(off, tk)]                                  # (cp, tk)
    else:
        k = k_ref[0]                                                     # (cp, tk)
        v = v_ref[0]                                                     # (cp, tk)

    q = qt_sc[...]                                                       # (tq, cp)
    # q is token-major, k channel-major -> natural (M,K)@(K,N) MXU contraction over cp.
    s = jnp.dot(q, k, preferred_element_type=jnp.float32)                # (tq, tk) f32

    if mask_kv:
        # Only tiles that extend past the real sequence length pay for the mask.
        def _masked(sv):
            col = ki * tk + lax.broadcasted_iota(jnp.int32, sv.shape, 1)
            return jnp.where(col < n_real, sv, _MASK_NEG)

        s = lax.cond((ki + 1) * tk > n_real, _masked, lambda sv: sv, s)

    m_prev = m_sc[...]
    m_new = jnp.maximum(m_prev, jnp.max(s, axis=-1, keepdims=True))
    alpha = jnp.exp(m_prev - m_new)
    p = jnp.exp(s - m_new)                                               # (tq, tk) f32
    l_sc[...] = alpha * l_sc[...] + jnp.sum(p, axis=-1, keepdims=True)
    # v is channel-major -> NT contraction over the kv axis (native MXU form).
    acc_sc[...] = alpha * acc_sc[...] + lax.dot_general(
        p.astype(v.dtype), v, (((1,), (1,)), ((), ())),
        preferred_element_type=jnp.float32)                              # (tq, cp)
    m_sc[...] = m_new

    @pl.when(ki == pl.num_programs(2) - 1)
    def _finalize():
        inv_l = pl.reciprocal(l_sc[...], approx=approx_recip)            # EUP when approx
        out_cm = (acc_sc[...] * inv_l).T                                 # (cp, tq) channel-major
        o_ref[0] = out_cm[:out_c, :].astype(o_ref.dtype)


# ---------------------------------------------------------------------------
# Wrapper
# ---------------------------------------------------------------------------
def simple_qkv_global_modeling(x_nchw, params, *, matmul_dtype=jnp.bfloat16):
    """x_nchw: (B, C, H, W).  params: wq/bq/wk/bk/wv/bv with Conv2d (out, in) weight layout."""
    B, C, H, W = x_nchw.shape
    N = H * W
    in_dtype = x_nchw.dtype
    scale = float(C) ** (-0.5)
    ms = jnp.dtype(matmul_dtype).itemsize
    cap, kv_budget = _tpu_vmem_caps()

    cp = _round_up(C, 128)                                   # lane/MXU-aligned channel dim

    # --- token tiling ------------------------------------------------------
    n_base = 128 if N <= 128 else _round_up(N, 256)          # 256-multiples fill the 256x256 MXU
    kv_resident = (4 * cp * n_base * ms) <= kv_budget        # K + V, double-buffered
    if kv_resident:
        n_pad = n_base
        tq = tk = min(256, n_pad)
    else:
        # Streaming fallback: big query tile -> K/V re-read traffic cut 4x vs tq=128.
        n_pad = _round_up(N, 512)
        tq, tk = 512, 256
    t_proj = next(t for t in (512, 256, 128) if n_pad % t == 0)

    # --- layout plumbing (channel-major everywhere; no wrapper transposes) --
    x_cm = x_nchw.reshape(B, C, N)
    if (cp != C) or (n_pad != N):
        # TODO(synk): this zero-pad HBM pass only triggers when C % 128 != 0 or N is not
        # tile-aligned; for production channel counts (multiples of 128) it disappears.
        x_cm = jnp.pad(x_cm, ((0, 0), (0, cp - C), (0, n_pad - N)))

    def pad_w(w, s=1.0):                                     # keep natural (out, in) layout
        return jnp.pad(w * s, ((0, cp - C), (0, cp - C)))    # (cp, cp)

    def pad_b(b, s=1.0):
        return jnp.pad((b * s).astype(jnp.float32), (0, cp - C))

    w_all = jnp.concatenate(
        [pad_w(params["wq"], scale), pad_w(params["wk"]), pad_w(params["wv"])],
        axis=0).astype(matmul_dtype)                         # (3cp, cp)
    b_all = jnp.concatenate(
        [pad_b(params["bq"], scale), pad_b(params["bk"]), pad_b(params["bv"])]
    ).reshape(3 * cp, 1)                                     # (3cp, 1) f32

    # --- Stage 1: fused QKV projection --------------------------------------
    proj_est = (2 * cp * t_proj * jnp.dtype(in_dtype).itemsize     # x blocks (double-buffered)
                + 2 * 3 * cp * cp * ms + 3 * cp * 4                # W, b
                + 2 * 3 * cp * t_proj * ms                         # qkv out blocks
                + 3 * cp * t_proj * 4)                             # f32 accumulator
    qkv = pl.pallas_call(
        _qkv_proj_kernel,
        out_shape=jax.ShapeDtypeStruct((B, 3 * cp, n_pad), matmul_dtype),
        grid_spec=pltpu.PrefetchScalarGridSpec(
            num_scalar_prefetch=0,
            grid=(B, n_pad // t_proj),
            in_specs=[
                pl.BlockSpec((1, cp, t_proj), lambda b, t: (b, 0, t)),
                # TODO(synk): pipeline_mode=pl.Buffered(1) would single-buffer the resident
                # weights (mainly VMEM headroom on v7x); kept default for portability.
                pl.BlockSpec((3 * cp, cp), lambda b, t: (0, 0)),
                pl.BlockSpec((3 * cp, 1), lambda b, t: (0, 0)),
            ],
            out_specs=pl.BlockSpec((1, 3 * cp, t_proj), lambda b, t: (b, 0, t)),
        ),
        compiler_params=pltpu.CompilerParams(
            dimension_semantics=("parallel", "parallel"),
            vmem_limit_bytes=_vmem_limit(proj_est, cap),
        ),
    )(x_cm, w_all, b_all)

    # --- Stage 2: flash attention (K/V VMEM-resident per batch when they fit) ---
    mask_kv = (n_pad != N)
    approx_recip = (matmul_dtype != jnp.float32)
    kv_tok = n_pad if kv_resident else tk
    attn_est = (2 * cp * tq * ms                                   # q blocks
                + 2 * 2 * cp * kv_tok * ms                         # k, v blocks
                + 2 * C * tq * jnp.dtype(in_dtype).itemsize        # out blocks
                + tq * cp * ms + 2 * tq * 4 + tq * cp * 4          # q_t / m / l / acc scratch
                + 2 * tq * tk * 4)                                 # s / p intermediates

    q_spec = pl.BlockSpec((1, cp, tq), lambda b, qi, ki: (b, 0, qi))
    if kv_resident:
        k_spec = pl.BlockSpec((1, cp, n_pad), lambda b, qi, ki: (b, 1, 0))
        v_spec = pl.BlockSpec((1, cp, n_pad), lambda b, qi, ki: (b, 2, 0))
    else:
        k_spec = pl.BlockSpec((1, cp, tk), lambda b, qi, ki: (b, 1, ki))
        v_spec = pl.BlockSpec((1, cp, tk), lambda b, qi, ki: (b, 2, ki))
    o_spec = pl.BlockSpec((1, C, tq), lambda b, qi, ki: (b, 0, qi))

    out_cm = pl.pallas_call(
        functools.partial(_flash_attn_kernel, tk=tk, n_real=N, out_c=C,
                          mask_kv=mask_kv, kv_resident=kv_resident,
                          approx_recip=approx_recip),
        out_shape=jax.ShapeDtypeStruct((B, C, n_pad), in_dtype),
        grid_spec=pltpu.PrefetchScalarGridSpec(
            num_scalar_prefetch=0,
            grid=(B, n_pad // tq, n_pad // tk),
            in_specs=[q_spec, k_spec, v_spec],
            out_specs=o_spec,
            scratch_shapes=[
                pltpu.VMEM((tq, cp), matmul_dtype),        # token-major Q (transposed once)
                pltpu.VMEM((tq, 1), jnp.float32),          # m (running max)
                pltpu.VMEM((tq, 1), jnp.float32),          # l (running denom)
                pltpu.VMEM((tq, cp), jnp.float32),         # acc
            ],
        ),
        compiler_params=pltpu.CompilerParams(
            dimension_semantics=("parallel", "parallel", "arbitrary"),
            vmem_limit_bytes=_vmem_limit(attn_est, cap),
        ),
    )(qkv, qkv, qkv)

    out = out_cm if n_pad == N else out_cm[:, :, :N]
    return out.reshape(B, C, H, W)


# ---------------------------------------------------------------------------
# Pure-JAX reference mirroring the PyTorch forward.
# ---------------------------------------------------------------------------
def _reference(x_nchw, params):
    B, C, H, W = x_nchw.shape
    N = H * W
    scale = float(C) ** (-0.5)
    x_tok = jnp.transpose(x_nchw.reshape(B, C, N), (0, 2, 1))          # (B, N, C)
    q = jnp.einsum("bnc,oc->bno", x_tok, params["wq"]) + params["bq"]
    k = jnp.einsum("bnc,oc->bno", x_tok, params["wk"]) + params["bk"]
    v = jnp.einsum("bnc,oc->bno", x_tok, params["wv"]) + params["bv"]
    attn = jax.nn.softmax(jnp.einsum("bqc,bkc->bqk", q, k) * scale, axis=-1)
    out = jnp.einsum("bqk,bkc->bqc", attn, v)
    return jnp.transpose(out, (0, 2, 1)).reshape(B, C, H, W)


if __name__ == "__main__":
    key = jax.random.PRNGKey(0)
    kx1, kx2, kwq, kbq, kwk, kbk, kwv, kbv = jax.random.split(key, 8)

    B, C = 2, 4
    fan = 1.0 / jnp.sqrt(jnp.asarray(C, jnp.float32))
    params = {
        "wq": jax.random.uniform(kwq, (C, C), jnp.float32, -fan, fan),
        "bq": jax.random.uniform(kbq, (C,), jnp.float32, -fan, fan),
        "wk": jax.random.uniform(kwk, (C, C), jnp.float32, -fan, fan),
        "bk": jax.random.uniform(kbk, (C,), jnp.float32, -fan, fan),
        "wv": jax.random.uniform(kwv, (C, C), jnp.float32, -fan, fan),
        "bv": jax.random.uniform(kbv, (C,), jnp.float32, -fan, fan),
    }

    # Case 1: tile-aligned spatial size (N = 256; no token padding / no key mask).
    x1 = jax.random.normal(kx1, (B, C, 16, 16), dtype=jnp.float32)
    ref1 = jax.block_until_ready(_reference(x1, params))

    out1_f32 = jax.block_until_ready(
        simple_qkv_global_modeling(x1, params, matmul_dtype=jnp.float32))
    assert out1_f32.shape == (B, C, 16, 16), out1_f32.shape
    assert jnp.allclose(out1_f32, ref1, atol=2e-4, rtol=2e-4), "f32 path mismatch (aligned)"

    out1_bf16 = jax.block_until_ready(simple_qkv_global_modeling(x1, params))
    assert out1_bf16.shape == (B, C, 16, 16), out1_bf16.shape
    assert jnp.allclose(out1_bf16, ref1, atol=1e-1, rtol=1e-1), "bf16 path mismatch vs reference"

    # Case 2: non-aligned spatial size (N = 289) -> exercises token padding, multiple kv
    # tiles, and the cond-gated last-tile key mask.
    x2 = jax.random.normal(kx2, (B, C, 17, 17), dtype=jnp.float32)
    ref2 = jax.block_until_ready(_reference(x2, params))
    out2_f32 = jax.block_until_ready(
        simple_qkv_global_modeling(x2, params, matmul_dtype=jnp.float32))
    assert out2_f32.shape == (B, C, 17, 17), out2_f32.shape
    assert jnp.allclose(out2_f32, ref2, atol=2e-4, rtol=2e-4), "f32 path mismatch (padded)"

    print("KERNEL_OK")
</pallas_src>

<mosaic_0001>
module attributes {stable_mosaic.version = 11 : i64} {
  func.func @_qkv_proj_kernel(%arg0: i32, %arg1: i32, %arg2: memref<1x128x256xf32, #tpu.memory_space<vmem>>, %arg3: memref<384x128xf32, #tpu.memory_space<vmem>>, %arg4: memref<384x1xf32, #tpu.memory_space<vmem>>, %arg5: memref<1x384x256xf32, #tpu.memory_space<vmem>>) attributes {dimension_semantics = [#tpu.dimension_semantics<parallel>, #tpu.dimension_semantics<parallel>], iteration_bounds = array<i64: 2, 1>, scalar_prefetch = 0 : i64, scratch_operands = 0 : i64, tpu.core_type = #tpu.core_type<tc>, window_params = [{transform_indices = @transform_0, window_bounds = array<i64: 1, 128, 256>}, {pipeline_mode = #tpu.pipeline_mode<synchronous>, transform_indices = @transform_1, window_bounds = array<i64: 384, 128>}, {pipeline_mode = #tpu.pipeline_mode<synchronous>, transform_indices = @transform_2, window_bounds = array<i64: 384, 1>}, {transform_indices = @transform_3, window_bounds = array<i64: 1, 384, 256>}]} {
    %c0 = arith.constant 0 : index
    %c0_0 = arith.constant 0 : index
    %c0_1 = arith.constant 0 : index
    %0 = vector.load %arg2[%c0, %c0_0, %c0_1] : memref<1x128x256xf32, #tpu.memory_space<vmem>>, vector<1x128x256xf32>
    %1 = vector.shape_cast %0 : vector<1x128x256xf32> to vector<128x256xf32>
    %c0_2 = arith.constant 0 : index
    %c0_3 = arith.constant 0 : index
    %2 = vector.load %arg3[%c0_2, %c0_3] : memref<384x128xf32, #tpu.memory_space<vmem>>, vector<384x128xf32>
    %cst = arith.constant dense<0.000000e+00> : vector<384x256xf32>
    %3 = tpu.matmul %2, %1, %cst {dimension_numbers = #tpu.dot_dimension_numbers<[1], [0], [0], [1], [0, 0, 1, 1], [], []>} : vector<384x128xf32>, vector<128x256xf32>, vector<384x256xf32> -> vector<384x256xf32>
    %c0_4 = arith.constant 0 : index
    %c0_5 = arith.constant 0 : index
    %4 = vector.load %arg4[%c0_4, %c0_5] : memref<384x1xf32, #tpu.memory_space<vmem>>, vector<384x1xf32>
    %5 = vector.broadcast %4 : vector<384x1xf32> to vector<384x256xf32>
    %6 = arith.addf %3, %5 : vector<384x256xf32>
    %c0_6 = arith.constant 0 : index
    %c0_7 = arith.constant 0 : index
    %c0_8 = arith.constant 0 : index
    %7 = vector.load %arg5[%c0_6, %c0_7, %c0_8] : memref<1x384x256xf32, #tpu.memory_space<vmem>>, vector<1x384x256xf32>
    %8 = vector.shape_cast %7 : vector<1x384x256xf32> to vector<384x256xf32>
    %9 = vector.shape_cast %6 : vector<384x256xf32> to vector<1x384x256xf32>
    tpu.vector_store %arg5[%c0_6, %c0_7, %c0_8], %9 {strides = array<i32>} : memref<1x384x256xf32, #tpu.memory_space<vmem>>, vector<1x384x256xf32>,
    return
  }
  func.func @transform_0(%arg0: i32, %arg1: i32) -> (i32, i32, i32) {
    %c0_i32 = arith.constant 0 : i32
    %c0_i32_0 = arith.constant 0 : i32
    return %arg0, %c0_i32, %arg1 : i32, i32, i32
  }
  func.func @transform_1(%arg0: i32, %arg1: i32) -> (i32, i32) {
    %c0_i32 = arith.constant 0 : i32
    %c0_i32_0 = arith.constant 0 : i32
    %c0_i32_1 = arith.constant 0 : i32
    return %c0_i32, %c0_i32_0 : i32, i32
  }
  func.func @transform_2(%arg0: i32, %arg1: i32) -> (i32, i32) {
    %c0_i32 = arith.constant 0 : i32
    %c0_i32_0 = arith.constant 0 : i32
    %c0_i32_1 = arith.constant 0 : i32
    return %c0_i32, %c0_i32_0 : i32, i32
  }
  func.func @transform_3(%arg0: i32, %arg1: i32) -> (i32, i32, i32) {
    %c0_i32 = arith.constant 0 : i32
    %c0_i32_0 = arith.constant 0 : i32
    return %arg0, %c0_i32, %arg1 : i32, i32, i32
  }
}

</mosaic_0001>

<llo_original>
// kernel: tpu_custom_call.1
$region0: #{tpu_custom_call.1}
  #allocation0 [shape = 'u32[]', space=smem, size = 0x4, offset = 0x4, fixed_abs, tag = 'smem constant byte address 0x4 - core index']
  #allocation1 [shape = 'u32[144,128]{1,0:T(1,128)}', space=vmem, size = 0x12000, scoped, tag = 'internal scratch']
  %s0 = inlined_call_operand.hbm [shape: f32[2,128,256], index: 0, kind: input, shape index: {}]
  %s1 = inlined_call_operand.vmem [shape: f32[384,128], index: 1, kind: input, shape index: {}]
  %s2 = inlined_call_operand.vmem [shape: f32[384,1], index: 2, kind: input, shape index: {}]
  %s3 = inlined_call_operand.hbm [shape: f32[2,384,256], index: 3, kind: output, shape index: {}]
  %s4 = sld [smem:[#allocation0]]
  $region49: #{tpu_custom_call.1} parent=0
    _
  %s6 = ssub.s32 1, %s4
  %s7 = scalar_select 0, %s6, %s4
  $region1: #{tpu_custom_call.1} parent=0
    #allocation2 [shape = 'u8[262144]{0}', space=vmem, size = 0x40000, scoped, tag = 'input window, operand 0']
    #allocation3 [shape = 's32[2]{0}', space=sflag, size = 0x8, scoped, tag = 'scoped memory for tpu_custom_call.1']
    #allocation4 [shape = 's32[2]{0}', space=sflag, size = 0x8, scoped, tag = 'scoped memory for tpu_custom_call.1']
    #allocation5 [shape = 'u8[786432]{0}', space=vmem, size = 0xc0000, scoped, tag = 'output window, operand 0']
    %8 = vsyncpa [#allocation3], 0
    %s9 = scalar_lea.sflag [#allocation3], 1
    %10 = vsyncpa %s9, 0
    %11 = vsyncpa [#allocation4], 0
    %s12 = scalar_lea.sflag [#allocation4], 1
    %13 = vsyncpa %s12, 0
    loop: start=0, step=1, limit=4
    $region2: #{tpu_custom_call.1} parent=1 // loop_pre_header
      _
    $region3: #{tpu_custom_call.1} parent=1 // loop_header
      %s15 = sphi 0, %s19
      %p16 = scmp.ge.s32.totalorder %s15, 4
      %s22 = sphi 0, %s34
      %s23 = sphi 0, %s30
      %s24 = sphi 0, %s22
      %s25 = sphi 0, %s23
      %s26 = sphi 0, %s24
      %s27 = sphi 0, %s25
      %s39 = sphi 0, %s41
      %s42 = sphi 0, %s39
      %s43 = sphi 0, %s42
      %s59 = sphi 0, %s43
      %s63 = sphi 0, %s63
      %s65 = sphi 0, %s63
      %s66 = sphi 0, %s65
      %s80 = sphi 0, %s66
      %s84 = sphi 0, %s84
      %s86 = sphi 0, %s84
      %s87 = sphi 0, %s86
      %s101 = sphi 0, %s87
      %s109 = sphi 0, %s111
      %s112 = sphi 0, %s109
      %s113 = sphi 0, %s112
      %s129 = sphi 0, %s113
    $region4: #{tpu_custom_call.1} parent=1 // loop_header_branch
      %18 = sbr.rel (%p16) target = $region8
    $region5: #{tpu_custom_call.1} parent=1 // loop_body
      %s20 = ssub.s32 %s15, 1
      %s21 = ssub.s32 %s15, 2
      %s28 = sadd.s32 1, %s23
      %p29 = scmp.ge.s32.totalorder %s28, 1
      %s30 = scalar_select %p29, 0, %s28
      %s31 = sadd.s32 1, %s22
      %s32 = scalar_select %p29, %s31, %s22
      %p33 = scmp.ge.s32.totalorder %s32, 2
      %s34 = scalar_select %p33, 0, %s32
      %s35 = ssub.s32 %s22, %s34
      %s36 = ssub.s32 %s23, %s30
      %s37 = sor.u32 %s35, %s36
      %p38 = scmp.eq.s32.totalorder %s37, 0
      %s40 = sadd.s32 %s39, 1
      %s41 = scalar_select %p38, %s39, %s40
      %p44 = pneg %p38
      %p45 = scmp.eq.s32.totalorder %s15, 1
      %p46 = por %p44, %p45
      %p47 = scmp.ne.s32.totalorder %s39, %s42
      %p48 = scmp.eq.s32.totalorder %s15, 0
      %p49 = por %p47, %p48
      %p50 = scmp.ne.s32.totalorder %s39, %s42
      %p51 = scmp.eq.s32.totalorder %s20, 1
      %p52 = por %p50, %p51
      %p53 = scmp.ne.s32.totalorder %s42, %s43
      %p54 = scmp.eq.s32.totalorder %s20, 0
      %p55 = por %p53, %p54
      %p56 = scmp.ne.s32.totalorder %s42, %s43
      %p57 = scmp.eq.s32.totalorder %s21, 1
      %p58 = por %p56, %p57
      %p60 = scmp.ne.s32.totalorder %s43, %s59
      %p61 = scmp.eq.s32.totalorder %s21, 0
      %p62 = por %p60, %p61
      %s64 = sadd.s32 %s63, 1
      %p67 = scmp.eq.s32.totalorder %s15, 1
      %p68 = scmp.ne.s32.totalorder %s63, %s65
      %p69 = scmp.eq.s32.totalorder %s15, 0
      %p70 = por %p68, %p69
      %p71 = scmp.ne.s32.totalorder %s63, %s65
      %p72 = scmp.eq.s32.totalorder %s20, 1
      %p73 = por %p71, %p72
      %p74 = scmp.ne.s32.totalorder %s65, %s66
      %p75 = scmp.eq.s32.totalorder %s20, 0
      %p76 = por %p74, %p75
      %p77 = scmp.ne.s32.totalorder %s65, %s66
      %p78 = scmp.eq.s32.totalorder %s21, 1
      %p79 = por %p77, %p78
      %p81 = scmp.ne.s32.totalorder %s66, %s80
      %p82 = scmp.eq.s32.totalorder %s21, 0
      %p83 = por %p81, %p82
      %s85 = sadd.s32 %s84, 1
      %p88 = scmp.eq.s32.totalorder %s15, 1
      %p89 = scmp.ne.s32.totalorder %s84, %s86
      %p90 = scmp.eq.s32.totalorder %s15, 0
      %p91 = por %p89, %p90
      %p92 = scmp.ne.s32.totalorder %s84, %s86
      %p93 = scmp.eq.s32.totalorder %s20, 1
      %p94 = por %p92, %p93
      %p95 = scmp.ne.s32.totalorder %s86, %s87
      %p96 = scmp.eq.s32.totalorder %s20, 0
      %p97 = por %p95, %p96
      %p98 = scmp.ne.s32.totalorder %s86, %s87
      %p99 = scmp.eq.s32.totalorder %s21, 1
      %p100 = por %p98, %p99
      %p102 = scmp.ne.s32.totalorder %s87, %s101
      %p103 = scmp.eq.s32.totalorder %s21, 0
      %p104 = por %p102, %p103
      %s105 = ssub.s32 %s22, %s34
      %s106 = ssub.s32 %s23, %s30
      %s107 = sor.u32 %s105, %s106
      %p108 = scmp.eq.s32.totalorder %s107, 0
      %s110 = sadd.s32 %s109, 1
      %s111 = scalar_select %p108, %s109, %s110
      %p114 = pneg %p108
      %p115 = scmp.eq.s32.totalorder %s15, 1
      %p116 = por %p114, %p115
      %p117 = scmp.ne.s32.totalorder %s109, %s112
      %p118 = scmp.eq.s32.totalorder %s15, 0
      %p119 = por %p117, %p118
      %p120 = scmp.ne.s32.totalorder %s109, %s112
      %p121 = scmp.eq.s32.totalorder %s20, 1
      %p122 = por %p120, %p121
      %p123 = scmp.ne.s32.totalorder %s112, %s113
      %p124 = scmp.eq.s32.totalorder %s20, 0
      %p125 = por %p123, %p124
      %p126 = scmp.ne.s32.totalorder %s112, %s113
      %p127 = scmp.eq.s32.totalorder %s21, 1
      %p128 = por %p126, %p127
      %p130 = scmp.ne.s32.totalorder %s113, %s129
      %p131 = scmp.eq.s32.totalorder %s21, 0
      %p132 = por %p130, %p131
      %p133 = scmp.le.s32.totalorder 1, %s15
      %p134 = scmp.lt.s32.totalorder %s15, 3
      %p135 = pnand %p133, %p134
      %p136 = pneg %p135
      // Predicated region
      $region9: #{tpu_custom_call.1} parent=5 // pred_check
        _
      $region10: #{tpu_custom_call.1} parent=5 // pred_check_branch
        %138 = sbr.rel (%p135) target = $region12
      $region11: #{tpu_custom_call.1} parent=5 // pred_region
        %s139 = ssub.s32 %s15, 1
        // Predicated region
        $region13: #{tpu_custom_call.1} parent=11 // pred_check
          %p140 = pneg %p76
        $region14: #{tpu_custom_call.1} parent=11 // pred_check_branch
          %142 = sbr.rel (%p140) target = $region16
        $region15: #{tpu_custom_call.1} parent=11 // pred_region
          _
        $region16: #{tpu_custom_call.1} parent=11 // pred_fallthru
          _
        // Predicated region
        $region17: #{tpu_custom_call.1} parent=11 // pred_check
          %p143 = pneg %p97
        $region18: #{tpu_custom_call.1} parent=11 // pred_check_branch
          %145 = sbr.rel (%p143) target = $region20
        $region19: #{tpu_custom_call.1} parent=11 // pred_region
          _
        $region20: #{tpu_custom_call.1} parent=11 // pred_fallthru
          _
      $region12: #{tpu_custom_call.1} parent=5 // pred_fallthru
        _
      %p146 = scmp.lt.s32.totalorder %s15, 2
      // Predicated region
      $region21: #{tpu_custom_call.1} parent=5 // pred_check
        %p147 = pneg %p146
      $region22: #{tpu_custom_call.1} parent=5 // pred_check_branch
        %149 = sbr.rel (%p147) target = $region24
      $region23: #{tpu_custom_call.1} parent=5 // pred_region
        // Predicated region
        $region25: #{tpu_custom_call.1} parent=23 // pred_check
          %p150 = pneg %p49
        $region26: #{tpu_custom_call.1} parent=23 // pred_check_branch
          %152 = sbr.rel (%p150) target = $region28
        $region27: #{tpu_custom_call.1} parent=23 // pred_region
          %s153 = sand.u32 %s39, 1
          %s154 = scalar_lea.sflag [#allocation3], %s153
          %s155 = sand.u32 %s39, 1
          %s156 = smul.addr %s155, 256
          %s157 = scalar_lea.vmem [#allocation2], %s156
          %s158 = smul.u32 2, %s23
          %s160 = ssub.s32 4096, 4096
          %161 = vsyncadd %s154, %s160
          %s162 = smul.addr %s22, 32
          %s163 = sadd.s32 %s158, %s162
          %s164 = smul.addr %s163, 128
          %s165 = scalar_lea.hbm %s0, %s164
          %s166 = sshll.u32 %s157, 4
          %s167 = int_to_ptr.vmem [resolvable:$true] %s166
          %172 = dma.hbm_to_vmem [thread:$0]  %s165, 4096, %s167, %s154, 256, 256, 16
        $region28: #{tpu_custom_call.1} parent=23 // pred_fallthru
          _
      $region24: #{tpu_custom_call.1} parent=5 // pred_fallthru
        _
      %p173 = scmp.le.s32.totalorder 1, %s15
      %p174 = scmp.lt.s32.totalorder %s15, 3
      %p175 = pnand %p173, %p174
      %p176 = pneg %p175
      // Predicated region
      $region29: #{tpu_custom_call.1} parent=5 // pred_check
        _
      $region30: #{tpu_custom_call.1} parent=5 // pred_check_branch
        %178 = sbr.rel (%p175) target = $region32
      $region31: #{tpu_custom_call.1} parent=5 // pred_region
        %s179 = ssub.s32 %s15, 1
        %s180 = sand.u32 %s42, 1
        %s181 = scalar_lea.sflag [#allocation3], %s180
        %s182 = sand.u32 %s42, 1
        %s183 = smul.addr %s182, 256
        %s184 = scalar_lea.vmem [#allocation2], %s183
        // Predicated region
        $region33: #{tpu_custom_call.1} parent=31 // pred_check
          %p185 = pneg %p55
        $region34: #{tpu_custom_call.1} parent=31 // pred_check_branch
          %187 = sbr.rel (%p185) target = $region36
        $region35: #{tpu_custom_call.1} parent=31 // pred_region
          %188 = dma.done %s181, 4096
        $region36: #{tpu_custom_call.1} parent=31 // pred_fallthru
          _
        %s189 = sand.u32 %s42, 1
        %s190 = scalar_lea.sflag [#allocation3], %s189
        %s191 = sand.u32 %s42, 1
        %s192 = smul.addr %s191, 256
        %s193 = scalar_lea.vmem [#allocation2], %s192
        %p194 = pneg %p55
        %p195 = pneg %p52
        %p196 = pneg %p76
        %p197 = pneg %p73
        %p198 = pneg %p97
        %p199 = pneg %p94
        %p200 = pneg %p125
        %p201 = pneg %p122
        %s202 = sand.u32 %s112, 1
        %s203 = scalar_lea.sflag [#allocation4], %s202
        %s204 = sand.u32 %s112, 1
        %s205 = smul.addr %s204, 768
        %s206 = scalar_lea.vmem [#allocation5], %s205
        %s207 = smul.u32 2, %s25
        %s208 = smul.u32 2, %s25
        %v209 = vld [vmem:[%s184] sm:$0xff]
        %v210 = vld [vmem:[%s184 + $0x8] sm:$0xff]
        %v211 = vld [vmem:[%s184 + $0x10] sm:$0xff]
        %v212 = vld [vmem:[%s184 + $0x18] sm:$0xff]
        %v213 = vld [vmem:[%s184 + $0x20] sm:$0xff]
        %v214 = vld [vmem:[%s184 + $0x28] sm:$0xff]
        %v215 = vld [vmem:[%s184 + $0x30] sm:$0xff]
        %v216 = vld [vmem:[%s184 + $0x38] sm:$0xff]
        %v217 = vld [vmem:[%s184 + $0x40] sm:$0xff]
        %v218 = vld [vmem:[%s184 + $0x48] sm:$0xff]
        %v219 = vld [vmem:[%s184 + $0x50] sm:$0xff]
        %v220 = vld [vmem:[%s184 + $0x58] sm:$0xff]
        %v221 = vld [vmem:[%s184 + $0x60] sm:$0xff]
        %v222 = vld [vmem:[%s184 + $0x68] sm:$0xff]
        %v223 = vld [vmem:[%s184 + $0x70] sm:$0xff]
        %v224 = vld [vmem:[%s184 + $0x78] sm:$0xff]
        %v225 = vld [vmem:[%s184 + $0x80] sm:$0xff]
        %v226 = vld [vmem:[%s184 + $0x88] sm:$0xff]
        %v227 = vld [vmem:[%s184 + $0x90] sm:$0xff]
        %v228 = vld [vmem:[%s184 + $0x98] sm:$0xff]
        %v229 = vld [vmem:[%s184 + $0xa0] sm:$0xff]
        %v230 = vld [vmem:[%s184 + $0xa8] sm:$0xff]
        %v231 = vld [vmem:[%s184 + $0xb0] sm:$0xff]
        %v232 = vld [vmem:[%s184 + $0xb8] sm:$0xff]
        %v233 = vld [vmem:[%s184 + $0xc0] sm:$0xff]
        %v234 = vld [vmem:[%s184 + $0xc8] sm:$0xff]
        %v235 = vld [vmem:[%s184 + $0xd0] sm:$0xff]
        %v236 = vld [vmem:[%s184 + $0xd8] sm:$0xff]
        %v237 = vld [vmem:[%s184 + $0xe0] sm:$0xff]
        %v238 = vld [vmem:[%s184 + $0xe8] sm:$0xff]
        %v239 = vld [vmem:[%s184 + $0xf0] sm:$0xff]
        %v240 = vld [vmem:[%s184 + $0xf8] sm:$0xff]
        %v241 = vld [vmem:[%s1] sm:$0xff]
        %v242 = vld [vmem:[%s1 + $0x8] sm:$0xff]
        %v243 = vld [vmem:[%s1 + $0x10] sm:$0xff]
        %v244 = vld [vmem:[%s1 + $0x18] sm:$0xff]
        %v245 = vld [vmem:[%s1 + $0x20] sm:$0xff]
        %v246 = vld [vmem:[%s1 + $0x28] sm:$0xff]
        %v247 = vld [vmem:[%s1 + $0x30] sm:$0xff]
        %v248 = vld [vmem:[%s1 + $0x38] sm:$0xff]
        %v249 = vld [vmem:[%s1 + $0x40] sm:$0xff]
        %v250 = vld [vmem:[%s1 + $0x48] sm:$0xff]
        %v251 = vld [vmem:[%s1 + $0x50] sm:$0xff]
        %v252 = vld [vmem:[%s1 + $0x58] sm:$0xff]
        %v253 = vld [vmem:[%s1 + $0x60] sm:$0xff]
        %v254 = vld [vmem:[%s1 + $0x68] sm:$0xff]
        %v255 = vld [vmem:[%s1 + $0x70] sm:$0xff]
        %v256 = vld [vmem:[%s1 + $0x78] sm:$0xff]
        %v257 = vld [vmem:[%s1 + $0x80] sm:$0xff]
        %v258 = vld [vmem:[%s1 + $0x88] sm:$0xff]
        %v259 = vld [vmem:[%s1 + $0x90] sm:$0xff]
        %v260 = vld [vmem:[%s1 + $0x98] sm:$0xff]
        %v261 = vld [vmem:[%s1 + $0xa0] sm:$0xff]
        %v262 = vld [vmem:[%s1 + $0xa8] sm:$0xff]
        %v263 = vld [vmem:[%s1 + $0xb0] sm:$0xff]
        %v264 = vld [vmem:[%s1 + $0xb8] sm:$0xff]
        %v265 = vld [vmem:[%s1 + $0xc0] sm:$0xff]
        %v266 = vld [vmem:[%s1 + $0xc8] sm:$0xff]
        %v267 = vld [vmem:[%s1 + $0xd0] sm:$0xff]
        %v268 = vld [vmem:[%s1 + $0xd8] sm:$0xff]
        %v269 = vld [vmem:[%s1 + $0xe0] sm:$0xff]
        %v270 = vld [vmem:[%s1 + $0xe8] sm:$0xff]
        %v271 = vld [vmem:[%s1 + $0xf0] sm:$0xff]
        %v272 = vld [vmem:[%s1 + $0xf8] sm:$0xff]
        %v273 = vld [vmem:[%s1 + $0x100] sm:$0xff]
        %v274 = vld [vmem:[%s1 + $0x108] sm:$0xff]
        %v275 = vld [vmem:[%s1 + $0x110] sm:$0xff]
        %v276 = vld [vmem:[%s1 + $0x118] sm:$0xff]
        %v277 = vld [vmem:[%s1 + $0x120] sm:$0xff]
        %v278 = vld [vmem:[%s1 + $0x128] sm:$0xff]
        %v279 = vld [vmem:[%s1 + $0x130] sm:$0xff]
        %v280 = vld [vmem:[%s1 + $0x138] sm:$0xff]
        %v281 = vld [vmem:[%s1 + $0x140] sm:$0xff]
        %v282 = vld [vmem:[%s1 + $0x148] sm:$0xff]
        %v283 = vld [vmem:[%s1 + $0x150] sm:$0xff]
        %v284 = vld [vmem:[%s1 + $0x158] sm:$0xff]
        %v285 = vld [vmem:[%s1 + $0x160] sm:$0xff]
        %v286 = vld [vmem:[%s1 + $0x168] sm:$0xff]
        %v287 = vld [vmem:[%s1 + $0x170] sm:$0xff]
        %v288 = vld [vmem:[%s1 + $0x178] sm:$0xff]
        %v289 = vld [vmem:[%s2] sm:$0xff]
        %v290 = vld [vmem:[%s2 + $0x8] sm:$0xff]
        %v291 = vld [vmem:[%s2 + $0x10] sm:$0xff]
        %v292 = vld [vmem:[%s2 + $0x18] sm:$0xff]
        %v293 = vld [vmem:[%s2 + $0x20] sm:$0xff]
        %v294 = vld [vmem:[%s2 + $0x28] sm:$0xff]
        %v295 = vld [vmem:[%s2 + $0x30] sm:$0xff]
        %v296 = vld [vmem:[%s2 + $0x38] sm:$0xff]
        %v297 = vld [vmem:[%s2 + $0x40] sm:$0xff]
        %v298 = vld [vmem:[%s2 + $0x48] sm:$0xff]
        %v299 = vld [vmem:[%s2 + $0x50] sm:$0xff]
        %v300 = vld [vmem:[%s2 + $0x58] sm:$0xff]
        %v301 = vld [vmem:[%s2 + $0x60] sm:$0xff]
        %v302 = vld [vmem:[%s2 + $0x68] sm:$0xff]
        %v303 = vld [vmem:[%s2 + $0x70] sm:$0xff]
        %v304 = vld [vmem:[%s2 + $0x78] sm:$0xff]
        %v305 = vld [vmem:[%s2 + $0x80] sm:$0xff]
        %v306 = vld [vmem:[%s2 + $0x88] sm:$0xff]
        %v307 = vld [vmem:[%s2 + $0x90] sm:$0xff]
        %v308 = vld [vmem:[%s2 + $0x98] sm:$0xff]
        %v309 = vld [vmem:[%s2 + $0xa0] sm:$0xff]
        %v310 = vld [vmem:[%s2 + $0xa8] sm:$0xff]
        %v311 = vld [vmem:[%s2 + $0xb0] sm:$0xff]
        %v312 = vld [vmem:[%s2 + $0xb8] sm:$0xff]
        %v313 = vld [vmem:[%s2 + $0xc0] sm:$0xff]
        %v314 = vld [vmem:[%s2 + $0xc8] sm:$0xff]
        %v315 = vld [vmem:[%s2 + $0xd0] sm:$0xff]
        %v316 = vld [vmem:[%s2 + $0xd8] sm:$0xff]
        %v317 = vld [vmem:[%s2 + $0xe0] sm:$0xff]
        %v318 = vld [vmem:[%s2 + $0xe8] sm:$0xff]
        %v319 = vld [vmem:[%s2 + $0xf0] sm:$0xff]
        %v320 = vld [vmem:[%s2 + $0xf8] sm:$0xff]
        %v321 = vld [vmem:[%s2 + $0x100] sm:$0xff]
        %v322 = vld [vmem:[%s2 + $0x108] sm:$0xff]
        %v323 = vld [vmem:[%s2 + $0x110] sm:$0xff]
        %v324 = vld [vmem:[%s2 + $0x118] sm:$0xff]
        %v325 = vld [vmem:[%s2 + $0x120] sm:$0xff]
        %v326 = vld [vmem:[%s2 + $0x128] sm:$0xff]
        %v327 = vld [vmem:[%s2 + $0x130] sm:$0xff]
        %v328 = vld [vmem:[%s2 + $0x138] sm:$0xff]
        %v329 = vld [vmem:[%s2 + $0x140] sm:$0xff]
        %v330 = vld [vmem:[%s2 + $0x148] sm:$0xff]
        %v331 = vld [vmem:[%s2 + $0x150] sm:$0xff]
        %v332 = vld [vmem:[%s2 + $0x158] sm:$0xff]
        %v333 = vld [vmem:[%s2 + $0x160] sm:$0xff]
        %v334 = vld [vmem:[%s2 + $0x168] sm:$0xff]
        %v335 = vld [vmem:[%s2 + $0x170] sm:$0xff]
        %v336 = vld [vmem:[%s2 + $0x178] sm:$0xff]
        %338 = vset.pattern.permute.xlu0 0
        %339 = vperm.xlu0 %338, %v289
        %v340 = vpop.permute.xlu0 %339
        %343 = vset.pattern.permute.xlu0 0
        %344 = vperm.xlu0 %343, %v290
        %v345 = vpop.permute.xlu0 %344
        %348 = vset.pattern.permute.xlu0 0
        %349 = vperm.xlu0 %348, %v291
        %v350 = vpop.permute.xlu0 %349
        %353 = vset.pattern.permute.xlu0 0
        %354 = vperm.xlu0 %353, %v292
        %v355 = vpop.permute.xlu0 %354
        %358 = vset.pattern.permute.xlu0 0
        %359 = vperm.xlu0 %358, %v293
        %v360 = vpop.permute.xlu0 %359
        %363 = vset.pattern.permute.xlu0 0
        %364 = vperm.xlu0 %363, %v294
        %v365 = vpop.permute.xlu0 %364
        %368 = vset.pattern.permute.xlu0 0
        %369 = vperm.xlu0 %368, %v295
        %v370 = vpop.permute.xlu0 %369
        %373 = vset.pattern.permute.xlu0 0
        %374 = vperm.xlu0 %373, %v296
        %v375 = vpop.permute.xlu0 %374
        %378 = vset.pattern.permute.xlu0 0
        %379 = vperm.xlu0 %378, %v297
        %v380 = vpop.permute.xlu0 %379
        %383 = vset.pattern.permute.xlu0 0
        %384 = vperm.xlu0 %383, %v298
        %v385 = vpop.permute.xlu0 %384
        %388 = vset.pattern.permute.xlu0 0
        %389 = vperm.xlu0 %388, %v299
        %v390 = vpop.permute.xlu0 %389
        %393 = vset.pattern.permute.xlu0 0
        %394 = vperm.xlu0 %393, %v300
        %v395 = vpop.permute.xlu0 %394
        %398 = vset.pattern.permute.xlu0 0
        %399 = vperm.xlu0 %398, %v301
        %v400 = vpop.permute.xlu0 %399
        %403 = vset.pattern.permute.xlu0 0
        %404 = vperm.xlu0 %403, %v302
        %v405 = vpop.permute.xlu0 %404
        %408 = vset.pattern.permute.xlu0 0
        %409 = vperm.xlu0 %408, %v303
        %v410 = vpop.permute.xlu0 %409
        %413 = vset.pattern.permute.xlu0 0
        %414 = vperm.xlu0 %413, %v304
        %v415 = vpop.permute.xlu0 %414
        %418 = vset.pattern.permute.xlu0 0
        %419 = vperm.xlu0 %418, %v305
        %v420 = vpop.permute.xlu0 %419
        %423 = vset.pattern.permute.xlu0 0
        %424 = vperm.xlu0 %423, %v306
        %v425 = vpop.permute.xlu0 %424
        %428 = vset.pattern.permute.xlu0 0
        %429 = vperm.xlu0 %428, %v307
        %v430 = vpop.permute.xlu0 %429
        %433 = vset.pattern.permute.xlu0 0
        %434 = vperm.xlu0 %433, %v308
        %v435 = vpop.permute.xlu0 %434
        %438 = vset.pattern.permute.xlu0 0
        %439 = vperm.xlu0 %438, %v309
        %v440 = vpop.permute.xlu0 %439
        %443 = vset.pattern.permute.xlu0 0
        %444 = vperm.xlu0 %443, %v310
        %v445 = vpop.permute.xlu0 %444
        %448 = vset.pattern.permute.xlu0 0
        %449 = vperm.xlu0 %448, %v311
        %v450 = vpop.permute.xlu0 %449
        %453 = vset.pattern.permute.xlu0 0
        %454 = vperm.xlu0 %453, %v312
        %v455 = vpop.permute.xlu0 %454
        %458 = vset.pattern.permute.xlu0 0
        %459 = vperm.xlu0 %458, %v313
        %v460 = vpop.permute.xlu0 %459
        %463 = vset.pattern.permute.xlu0 0
        %464 = vperm.xlu0 %463, %v314
        %v465 = vpop.permute.xlu0 %464
        %468 = vset.pattern.permute.xlu0 0
        %469 = vperm.xlu0 %468, %v315
        %v470 = vpop.permute.xlu0 %469
        %473 = vset.pattern.permute.xlu0 0
        %474 = vperm.xlu0 %473, %v316
        %v475 = vpop.permute.xlu0 %474
        %478 = vset.pattern.permute.xlu0 0
        %479 = vperm.xlu0 %478, %v317
        %v480 = vpop.permute.xlu0 %479
        %483 = vset.pattern.permute.xlu0 0
        %484 = vperm.xlu0 %483, %v318
        %v485 = vpop.permute.xlu0 %484
        %488 = vset.pattern.permute.xlu0 0
        %489 = vperm.xlu0 %488, %v319
        %v490 = vpop.permute.xlu0 %489
        %493 = vset.pattern.permute.xlu0 0
        %494 = vperm.xlu0 %493, %v320
        %v495 = vpop.permute.xlu0 %494
        %498 = vset.pattern.permute.xlu0 0
        %499 = vperm.xlu0 %498, %v321
        %v500 = vpop.permute.xlu0 %499
        %503 = vset.pattern.permute.xlu0 0
        %504 = vperm.xlu0 %503, %v322
        %v505 = vpop.permute.xlu0 %504
        %508 = vset.pattern.permute.xlu0 0
        %509 = vperm.xlu0 %508, %v323
        %v510 = vpop.permute.xlu0 %509
        %513 = vset.pattern.permute.xlu0 0
        %514 = vperm.xlu0 %513, %v324
        %v515 = vpop.permute.xlu0 %514
        %518 = vset.pattern.permute.xlu0 0
        %519 = vperm.xlu0 %518, %v325
        %v520 = vpop.permute.xlu0 %519
        %523 = vset.pattern.permute.xlu0 0
        %524 = vperm.xlu0 %523, %v326
        %v525 = vpop.permute.xlu0 %524
        %528 = vset.pattern.permute.xlu0 0
        %529 = vperm.xlu0 %528, %v327
        %v530 = vpop.permute.xlu0 %529
        %533 = vset.pattern.permute.xlu0 0
        %534 = vperm.xlu0 %533, %v328
        %v535 = vpop.permute.xlu0 %534
        %538 = vset.pattern.permute.xlu0 0
        %539 = vperm.xlu0 %538, %v329
        %v540 = vpop.permute.xlu0 %539
        %543 = vset.pattern.permute.xlu0 0
        %544 = vperm.xlu0 %543, %v330
        %v545 = vpop.permute.xlu0 %544
        %548 = vset.pattern.permute.xlu0 0
        %549 = vperm.xlu0 %548, %v331
        %v550 = vpop.permute.xlu0 %549
        %553 = vset.pattern.permute.xlu0 0
        %554 = vperm.xlu0 %553, %v332
        %v555 = vpop.permute.xlu0 %554
        %558 = vset.pattern.permute.xlu0 0
        %559 = vperm.xlu0 %558, %v333
        %v560 = vpop.permute.xlu0 %559
        %563 = vset.pattern.permute.xlu0 0
        %564 = vperm.xlu0 %563, %v334
        %v565 = vpop.permute.xlu0 %564
        %568 = vset.pattern.permute.xlu0 0
        %569 = vperm.xlu0 %568, %v335
        %v570 = vpop.permute.xlu0 %569
        %573 = vset.pattern.permute.xlu0 0
        %574 = vperm.xlu0 %573, %v336
        %v575 = vpop.permute.xlu0 %574
        %577 = vmatprep.subr.mxu0 %v210
        %578 = vmatpush1.msra.mxu0 %v209
        %579 = vmatprep.subr.mxu0 %v212
        %580 = vmatpush1.msra.mxu0 %v211
        %581 = vmatprep.subr.mxu0 %v214
        %582 = vmatpush1.msra.mxu0 %v213
        %583 = vmatprep.subr.mxu0 %v216
        %584 = vmatpush1.msra.mxu0 %v215
        %585 = vmatprep.subr.mxu0 %v218
        %586 = vmatpush1.msra.mxu0 %v217
        %587 = vmatprep.subr.mxu0 %v220
        %588 = vmatpush1.msra.mxu0 %v219
        %589 = vmatprep.subr.mxu0 %v222
        %590 = vmatpush1.msra.mxu0 %v221
        %591 = vmatprep.subr.mxu0 %v224
        %592 = vmatpush1.msra.mxu0 %v223
        %593 = vmatprep.subr.mxu0 %v226
        %594 = vmatpush1.msra.mxu0 %v225
        %595 = vmatprep.subr.mxu0 %v228
        %596 = vmatpush1.msra.mxu0 %v227
        %597 = vmatprep.subr.mxu0 %v230
        %598 = vmatpush1.msra.mxu0 %v229
        %599 = vmatprep.subr.mxu0 %v232
        %600 = vmatpush1.msra.mxu0 %v231
        %601 = vmatprep.subr.mxu0 %v234
        %602 = vmatpush1.msra.mxu0 %v233
        %603 = vmatprep.subr.mxu0 %v236
        %604 = vmatpush1.msra.mxu0 %v235
        %605 = vmatprep.subr.mxu0 %v238
        %606 = vmatpush1.msra.mxu0 %v237
        %607 = vmatprep.subr.mxu0 %v240
        %608 = vmatpush1.msra.mxu0 %v239
        %609 = vmatprep.subr.mxu0 0.0
        %610 = vmatpush1.msra.mxu0 0.0
        %611 = vmatprep.subr.mxu0 0.0
        %612 = vmatpush1.msra.mxu0 0.0
        %613 = vmatprep.subr.mxu0 0.0
        %614 = vmatpush1.msra.mxu0 0.0
        %615 = vmatprep.subr.mxu0 0.0
        %616 = vmatpush1.msra.mxu0 0.0
        %617 = vmatprep.subr.mxu0 0.0
        %618 = vmatpush1.msra.mxu0 0.0
        %619 = vmatprep.subr.mxu0 0.0
        %620 = vmatpush1.msra.mxu0 0.0
        %621 = vmatprep.subr.mxu0 0.0
        %622 = vmatpush1.msra.mxu0 0.0
        %623 = vmatprep.subr.mxu0 0.0
        %624 = vmatpush1.msra.mxu0 0.0
        %625 = vmatprep.subr.mxu0 0.0
        %626 = vmatpush1.msra.mxu0 0.0
        %627 = vmatprep.subr.mxu0 0.0
        %628 = vmatpush1.msra.mxu0 0.0
        %629 = vmatprep.subr.mxu0 0.0
        %630 = vmatpush1.msra.mxu0 0.0
        %631 = vmatprep.subr.mxu0 0.0
        %632 = vmatpush1.msra.mxu0 0.0
        %633 = vmatprep.subr.mxu0 0.0
        %634 = vmatpush1.msra.mxu0 0.0
        %635 = vmatprep.subr.mxu0 0.0
        %636 = vmatpush1.msra.mxu0 0.0
        %637 = vmatprep.subr.mxu0 0.0
        %638 = vmatpush1.msra.mxu0 0.0
        %639 = vmatprep.subr.mxu0 0.0
        %640 = vmatpush1.msra.mxu0 0.0
        %641 = vmatprep.mubr.f32.mxu0 0.0
        %642 = vmatmul.mubr.f32.gmra.mrb[0].mxu0 %v241
        %v643 = vpop.f32.mrb[0].mxu0
        %v644 = vadd.f32 %v340, %v643
        %v645 = vpop.f32.mrb[0].mxu0
        %v646 = vadd.f32 %v340, %v645
        %647 = vmatprep.mubr.f32.mxu0 0.0
        %648 = vmatmul.mubr.f32.gmra.mrb[0].mxu0 %v242
        %v649 = vpop.f32.mrb[0].mxu0
        %v650 = vadd.f32 %v345, %v649
        %v651 = vpop.f32.mrb[0].mxu0
        %v652 = vadd.f32 %v345, %v651
        %653 = vmatprep.mubr.f32.mxu0 0.0
        %654 = vmatmul.mubr.f32.gmra.mrb[0].mxu0 %v243
        %v655 = vpop.f32.mrb[0].mxu0
        %v656 = vadd.f32 %v350, %v655
        %v657 = vpop.f32.mrb[0].mxu0
        %v658 = vadd.f32 %v350, %v657
        %659 = vmatprep.mubr.f32.mxu0 0.0
        %660 = vmatmul.mubr.f32.gmra.mrb[0].mxu0 %v244
        %v661 = vpop.f32.mrb[0].mxu0
        %v662 = vadd.f32 %v355, %v661
        %v663 = vpop.f32.mrb[0].mxu0
        %v664 = vadd.f32 %v355, %v663
        %665 = vmatprep.mubr.f32.mxu0 0.0
        %666 = vmatmul.mubr.f32.gmra.mrb[0].mxu0 %v245
        %v667 = vpop.f32.mrb[0].mxu0
        %v668 = vadd.f32 %v360, %v667
        %v669 = vpop.f32.mrb[0].mxu0
        %v670 = vadd.f32 %v360, %v669
        %671 = vmatprep.mubr.f32.mxu0 0.0
        %672 = vmatmul.mubr.f32.gmra.mrb[0].mxu0 %v246
        %v673 = vpop.f32.mrb[0].mxu0
        %v674 = vadd.f32 %v365, %v673
        %v675 = vpop.f32.mrb[0].mxu0
        %v676 = vadd.f32 %v365, %v675
        %677 = vmatprep.mubr.f32.mxu0 0.0
        %678 = vmatmul.mubr.f32.gmra.mrb[0].mxu0 %v247
        %v679 = vpop.f32.mrb[0].mxu0
        %v680 = vadd.f32 %v370, %v679
        %v681 = vpop.f32.mrb[0].mxu0
        %v682 = vadd.f32 %v370, %v681
        %683 = vmatprep.mubr.f32.mxu0 0.0
        %684 = vmatmul.mubr.f32.gmra.mrb[0].mxu0 %v248
        %v685 = vpop.f32.mrb[0].mxu0
        %v686 = vadd.f32 %v375, %v685
        %v687 = vpop.f32.mrb[0].mxu0
        %v688 = vadd.f32 %v375, %v687
        %689 = vmatprep.mubr.f32.mxu0 0.0
        %690 = vmatmul.mubr.f32.gmra.mrb[0].mxu0 %v249
        %v691 = vpop.f32.mrb[0].mxu0
        %v692 = vadd.f32 %v380, %v691
        %v693 = vpop.f32.mrb[0].mxu0
        %v694 = vadd.f32 %v380, %v693
        %695 = vmatprep.mubr.f32.mxu0 0.0
        %696 = vmatmul.mubr.f32.gmra.mrb[0].mxu0 %v250
        %v697 = vpop.f32.mrb[0].mxu0
        %v698 = vadd.f32 %v385, %v697
        %v699 = vpop.f32.mrb[0].mxu0
        %v700 = vadd.f32 %v385, %v699
        %701 = vmatprep.mubr.f32.mxu0 0.0
        %702 = vmatmul.mubr.f32.gmra.mrb[0].mxu0 %v251
        %v703 = vpop.f32.mrb[0].mxu0
        %v704 = vadd.f32 %v390, %v703
        %v705 = vpop.f32.mrb[0].mxu0
        %v706 = vadd.f32 %v390, %v705
        %707 = vmatprep.mubr.f32.mxu0 0.0
        %708 = vmatmul.mubr.f32.gmra.mrb[0].mxu0 %v252
        %v709 = vpop.f32.mrb[0].mxu0
        %v710 = vadd.f32 %v395, %v709
        %v711 = vpop.f32.mrb[0].mxu0
        %v712 = vadd.f32 %v395, %v711
        %713 = vmatprep.mubr.f32.mxu0 0.0
        %714 = vmatmul.mubr.f32.gmra.mrb[0].mxu0 %v253
        %v715 = vpop.f32.mrb[0].mxu0
        %v716 = vadd.f32 %v400, %v715
        %v717 = vpop.f32.mrb[0].mxu0
        %v718 = vadd.f32 %v400, %v717
        %719 = vmatprep.mubr.f32.mxu0 0.0
        %720 = vmatmul.mubr.f32.gmra.mrb[0].mxu0 %v254
        %v721 = vpop.f32.mrb[0].mxu0
        %v722 = vadd.f32 %v405, %v721
        %v723 = vpop.f32.mrb[0].mxu0
        %v724 = vadd.f32 %v405, %v723
        %725 = vmatprep.mubr.f32.mxu0 0.0
        %726 = vmatmul.mubr.f32.gmra.mrb[0].mxu0 %v255
        %v727 = vpop.f32.mrb[0].mxu0
        %v728 = vadd.f32 %v410, %v727
        %v729 = vpop.f32.mrb[0].mxu0
        %v730 = vadd.f32 %v410, %v729
        %731 = vmatprep.mubr.f32.mxu0 0.0
        %732 = vmatmul.mubr.f32.gmra.mrb[0].mxu0 %v256
        %v733 = vpop.f32.mrb[0].mxu0
        %v734 = vadd.f32 %v415, %v733
        %v735 = vpop.f32.mrb[0].mxu0
        %v736 = vadd.f32 %v415, %v735
        %737 = vmatprep.mubr.f32.mxu0 0.0
        %738 = vmatmul.mubr.f32.gmra.mrb[0].mxu0 %v257
        %v739 = vpop.f32.mrb[0].mxu0
        %v740 = vadd.f32 %v420, %v739
        %v741 = vpop.f32.mrb[0].mxu0
        %v742 = vadd.f32 %v420, %v741
        %743 = vmatprep.mubr.f32.mxu0 0.0
        %744 = vmatmul.mubr.f32.gmra.mrb[0].mxu0 %v258
        %v745 = vpop.f32.mrb[0].mxu0
        %v746 = vadd.f32 %v425, %v745
        %v747 = vpop.f32.mrb[0].mxu0
        %v748 = vadd.f32 %v425, %v747
        %749 = vmatprep.mubr.f32.mxu0 0.0
        %750 = vmatmul.mubr.f32.gmra.mrb[0].mxu0 %v259
        %v751 = vpop.f32.mrb[0].mxu0
        %v752 = vadd.f32 %v430, %v751
        %v753 = vpop.f32.mrb[0].mxu0
        %v754 = vadd.f32 %v430, %v753
        %755 = vmatprep.mubr.f32.mxu0 0.0
        %756 = vmatmul.mubr.f32.gmra.mrb[0].mxu0 %v260
        %v757 = vpop.f32.mrb[0].mxu0
        %v758 = vadd.f32 %v435, %v757
        %v759 = vpop.f32.mrb[0].mxu0
        %v760 = vadd.f32 %v435, %v759
        %761 = vmatprep.mubr.f32.mxu0 0.0
        %762 = vmatmul.mubr.f32.gmra.mrb[0].mxu0 %v261
        %v763 = vpop.f32.mrb[0].mxu0
        %v764 = vadd.f32 %v440, %v763
        %v765 = vpop.f32.mrb[0].mxu0
        %v766 = vadd.f32 %v440, %v765
        %767 = vmatprep.mubr.f32.mxu0 0.0
        %768 = vmatmul.mubr.f32.gmra.mrb[0].mxu0 %v262
        %v769 = vpop.f32.mrb[0].mxu0
        %v770 = vadd.f32 %v445, %v769
        %v771 = vpop.f32.mrb[0].mxu0
        %v772 = vadd.f32 %v445, %v771
        %773 = vmatprep.mubr.f32.mxu0 0.0
        %774 = vmatmul.mubr.f32.gmra.mrb[0].mxu0 %v263
        %v775 = vpop.f32.mrb[0].mxu0
        %v776 = vadd.f32 %v450, %v775
        %v777 = vpop.f32.mrb[0].mxu0
        %v778 = vadd.f32 %v450, %v777
        %779 = vmatprep.mubr.f32.mxu0 0.0
        %780 = vmatmul.mubr.f32.gmra.mrb[0].mxu0 %v264
        %v781 = vpop.f32.mrb[0].mxu0
        %v782 = vadd.f32 %v455, %v781
        %v783 = vpop.f32.mrb[0].mxu0
        %v784 = vadd.f32 %v455, %v783
        %785 = vmatprep.mubr.f32.mxu0 0.0
        %786 = vmatmul.mubr.f32.gmra.mrb[0].mxu0 %v265
        %v787 = vpop.f32.mrb[0].mxu0
        %v788 = vadd.f32 %v460, %v787
        %v789 = vpop.f32.mrb[0].mxu0
        %v790 = vadd.f32 %v460, %v789
        %791 = vmatprep.mubr.f32.mxu0 0.0
        %792 = vmatmul.mubr.f32.gmra.mrb[0].mxu0 %v266
        %v793 = vpop.f32.mrb[0].mxu0
        %v794 = vadd.f32 %v465, %v793
        %v795 = vpop.f32.mrb[0].mxu0
        %v796 = vadd.f32 %v465, %v795
        %797 = vmatprep.mubr.f32.mxu0 0.0
        %798 = vmatmul.mubr.f32.gmra.mrb[0].mxu0 %v267
        %v799 = vpop.f32.mrb[0].mxu0
        %v800 = vadd.f32 %v470, %v799
        %v801 = vpop.f32.mrb[0].mxu0
        %v802 = vadd.f32 %v470, %v801
        %803 = vmatprep.mubr.f32.mxu0 0.0
        %804 = vmatmul.mubr.f32.gmra.mrb[0].mxu0 %v268
        %v805 = vpop.f32.mrb[0].mxu0
        %v806 = vadd.f32 %v475, %v805
        %v807 = vpop.f32.mrb[0].mxu0
        %v808 = vadd.f32 %v475, %v807
        %809 = vmatprep.mubr.f32.mxu0 0.0
        %810 = vmatmul.mubr.f32.gmra.mrb[0].mxu0 %v269
        %v811 = vpop.f32.mrb[0].mxu0
        %v812 = vadd.f32 %v480, %v811
        %v813 = vpop.f32.mrb[0].mxu0
        %v814 = vadd.f32 %v480, %v813
        %815 = vmatprep.mubr.f32.mxu0 0.0
        %816 = vmatmul.mubr.f32.gmra.mrb[0].mxu0 %v270
        %v817 = vpop.f32.mrb[0].mxu0
        %v818 = vadd.f32 %v485, %v817
        %v819 = vpop.f32.mrb[0].mxu0
        %v820 = vadd.f32 %v485, %v819
        %821 = vmatprep.mubr.f32.mxu0 0.0
        %822 = vmatmul.mubr.f32.gmra.mrb[0].mxu0 %v271
        %v823 = vpop.f32.mrb[0].mxu0
        %v824 = vadd.f32 %v490, %v823
        %v825 = vpop.f32.mrb[0].mxu0
        %v826 = vadd.f32 %v490, %v825
        %827 = vmatprep.mubr.f32.mxu0 0.0
        %828 = vmatmul.mubr.f32.gmra.mrb[0].mxu0 %v272
        %v829 = vpop.f32.mrb[0].mxu0
        %v830 = vadd.f32 %v495, %v829
        %v831 = vpop.f32.mrb[0].mxu0
        %v832 = vadd.f32 %v495, %v831
        %833 = vmatprep.mubr.f32.mxu0 0.0
        %834 = vmatmul.mubr.f32.gmra.mrb[0].mxu0 %v273
        %v835 = vpop.f32.mrb[0].mxu0
        %v836 = vadd.f32 %v500, %v835
        %v837 = vpop.f32.mrb[0].mxu0
        %v838 = vadd.f32 %v500, %v837
        %839 = vmatprep.mubr.f32.mxu0 0.0
        %840 = vmatmul.mubr.f32.gmra.mrb[0].mxu0 %v274
        %v841 = vpop.f32.mrb[0].mxu0
        %v842 = vadd.f32 %v505, %v841
        %v843 = vpop.f32.mrb[0].mxu0
        %v844 = vadd.f32 %v505, %v843
        %845 = vmatprep.mubr.f32.mxu0 0.0
        %846 = vmatmul.mubr.f32.gmra.mrb[0].mxu0 %v275
        %v847 = vpop.f32.mrb[0].mxu0
        %v848 = vadd.f32 %v510, %v847
        %v849 = vpop.f32.mrb[0].mxu0
        %v850 = vadd.f32 %v510, %v849
        %851 = vmatprep.mubr.f32.mxu0 0.0
        %852 = vmatmul.mubr.f32.gmra.mrb[0].mxu0 %v276
        %v853 = vpop.f32.mrb[0].mxu0
        %v854 = vadd.f32 %v515, %v853
        %v855 = vpop.f32.mrb[0].mxu0
        %v856 = vadd.f32 %v515, %v855
        %857 = vmatprep.mubr.f32.mxu0 0.0
        %858 = vmatmul.mubr.f32.gmra.mrb[0].mxu0 %v277
        %v859 = vpop.f32.mrb[0].mxu0
        %v860 = vadd.f32 %v520, %v859
        %v861 = vpop.f32.mrb[0].mxu0
        %v862 = vadd.f32 %v520, %v861
        %863 = vmatprep.mubr.f32.mxu0 0.0
        %864 = vmatmul.mubr.f32.gmra.mrb[0].mxu0 %v278
        %v865 = vpop.f32.mrb[0].mxu0
        %v866 = vadd.f32 %v525, %v865
        %v867 = vpop.f32.mrb[0].mxu0
        %v868 = vadd.f32 %v525, %v867
        %869 = vmatprep.mubr.f32.mxu0 0.0
        %870 = vmatmul.mubr.f32.gmra.mrb[0].mxu0 %v279
        %v871 = vpop.f32.mrb[0].mxu0
        %v872 = vadd.f32 %v530, %v871
        %v873 = vpop.f32.mrb[0].mxu0
        %v874 = vadd.f32 %v530, %v873
        %875 = vmatprep.mubr.f32.mxu0 0.0
        %876 = vmatmul.mubr.f32.gmra.mrb[0].mxu0 %v280
        %v877 = vpop.f32.mrb[0].mxu0
        %v878 = vadd.f32 %v535, %v877
        %v879 = vpop.f32.mrb[0].mxu0
        %v880 = vadd.f32 %v535, %v879
        %881 = vmatprep.mubr.f32.mxu0 0.0
        %882 = vmatmul.mubr.f32.gmra.mrb[0].mxu0 %v281
        %v883 = vpop.f32.mrb[0].mxu0
        %v884 = vadd.f32 %v540, %v883
        %v885 = vpop.f32.mrb[0].mxu0
        %v886 = vadd.f32 %v540, %v885
        %887 = vmatprep.mubr.f32.mxu0 0.0
        %888 = vmatmul.mubr.f32.gmra.mrb[0].mxu0 %v282
        %v889 = vpop.f32.mrb[0].mxu0
        %v890 = vadd.f32 %v545, %v889
        %v891 = vpop.f32.mrb[0].mxu0
        %v892 = vadd.f32 %v545, %v891
        %893 = vmatprep.mubr.f32.mxu0 0.0
        %894 = vmatmul.mubr.f32.gmra.mrb[0].mxu0 %v283
        %v895 = vpop.f32.mrb[0].mxu0
        %v896 = vadd.f32 %v550, %v895
        %v897 = vpop.f32.mrb[0].mxu0
        %v898 = vadd.f32 %v550, %v897
        %899 = vmatprep.mubr.f32.mxu0 0.0
        %900 = vmatmul.mubr.f32.gmra.mrb[0].mxu0 %v284
        %v901 = vpop.f32.mrb[0].mxu0
        %v902 = vadd.f32 %v555, %v901
        %v903 = vpop.f32.mrb[0].mxu0
        %v904 = vadd.f32 %v555, %v903
        %905 = vmatprep.mubr.f32.mxu0 0.0
        %906 = vmatmul.mubr.f32.gmra.mrb[0].mxu0 %v285
        %v907 = vpop.f32.mrb[0].mxu0
        %v908 = vadd.f32 %v560, %v907
        %v909 = vpop.f32.mrb[0].mxu0
        %v910 = vadd.f32 %v560, %v909
        %911 = vmatprep.mubr.f32.mxu0 0.0
        %912 = vmatmul.mubr.f32.gmra.mrb[0].mxu0 %v286
        %v913 = vpop.f32.mrb[0].mxu0
        %v914 = vadd.f32 %v565, %v913
        %v915 = vpop.f32.mrb[0].mxu0
        %v916 = vadd.f32 %v565, %v915
        %917 = vmatprep.mubr.f32.mxu0 0.0
        %918 = vmatmul.mubr.f32.gmra.mrb[0].mxu0 %v287
        %v919 = vpop.f32.mrb[0].mxu0
        %v920 = vadd.f32 %v570, %v919
        %v921 = vpop.f32.mrb[0].mxu0
        %v922 = vadd.f32 %v570, %v921
        %923 = vmatprep.mubr.f32.mxu0 0.0
        %924 = vmatmul.mubr.f32.gmra.mrb[0].mxu0 %v288
        %v925 = vpop.f32.mrb[0].mxu0
        %v926 = vadd.f32 %v575, %v925
        %v927 = vpop.f32.mrb[0].mxu0
        %v928 = vadd.f32 %v575, %v927
        %929 = vdwg.mxu0
        %930 = vst [vmem:[%s206] sm:$0xff] %v644
        %931 = vst [vmem:[%s206 + $0x8] sm:$0xff] %v646
        %932 = vst [vmem:[%s206 + $0x10] sm:$0xff] %v650
        %933 = vst [vmem:[%s206 + $0x18] sm:$0xff] %v652
        %934 = vst [vmem:[%s206 + $0x20] sm:$0xff] %v656
        %935 = vst [vmem:[%s206 + $0x28] sm:$0xff] %v658
        %936 = vst [vmem:[%s206 + $0x30] sm:$0xff] %v662
        %937 = vst [vmem:[%s206 + $0x38] sm:$0xff] %v664
        %938 = vst [vmem:[%s206 + $0x40] sm:$0xff] %v668
        %939 = vst [vmem:[%s206 + $0x48] sm:$0xff] %v670
        %940 = vst [vmem:[%s206 + $0x50] sm:$0xff] %v674
        %941 = vst [vmem:[%s206 + $0x58] sm:$0xff] %v676
        %942 = vst [vmem:[%s206 + $0x60] sm:$0xff] %v680
        %943 = vst [vmem:[%s206 + $0x68] sm:$0xff] %v682
        %944 = vst [vmem:[%s206 + $0x70] sm:$0xff] %v686
        %945 = vst [vmem:[%s206 + $0x78] sm:$0xff] %v688
        %946 = vst [vmem:[%s206 + $0x80] sm:$0xff] %v692
        %947 = vst [vmem:[%s206 + $0x88] sm:$0xff] %v694
        %948 = vst [vmem:[%s206 + $0x90] sm:$0xff] %v698
        %949 = vst [vmem:[%s206 + $0x98] sm:$0xff] %v700
        %950 = vst [vmem:[%s206 + $0xa0] sm:$0xff] %v704
        %951 = vst [vmem:[%s206 + $0xa8] sm:$0xff] %v706
        %952 = vst [vmem:[%s206 + $0xb0] sm:$0xff] %v710
        %953 = vst [vmem:[%s206 + $0xb8] sm:$0xff] %v712
        %954 = vst [vmem:[%s206 + $0xc0] sm:$0xff] %v716
        %955 = vst [vmem:[%s206 + $0xc8] sm:$0xff] %v718
        %956 = vst [vmem:[%s206 + $0xd0] sm:$0xff] %v722
        %957 = vst [vmem:[%s206 + $0xd8] sm:$0xff] %v724
        %958 = vst [vmem:[%s206 + $0xe0] sm:$0xff] %v728
        %959 = vst [vmem:[%s206 + $0xe8] sm:$0xff] %v730
        %960 = vst [vmem:[%s206 + $0xf0] sm:$0xff] %v734
        %961 = vst [vmem:[%s206 + $0xf8] sm:$0xff] %v736
        %962 = vst [vmem:[%s206 + $0x100] sm:$0xff] %v740
        %963 = vst [vmem:[%s206 + $0x108] sm:$0xff] %v742
        %964 = vst [vmem:[%s206 + $0x110] sm:$0xff] %v746
        %965 = vst [vmem:[%s206 + $0x118] sm:$0xff] %v748
        %966 = vst [vmem:[%s206 + $0x120] sm:$0xff] %v752
        %967 = vst [vmem:[%s206 + $0x128] sm:$0xff] %v754
        %968 = vst [vmem:[%s206 + $0x130] sm:$0xff] %v758
        %969 = vst [vmem:[%s206 + $0x138] sm:$0xff] %v760
        %970 = vst [vmem:[%s206 + $0x140] sm:$0xff] %v764
        %971 = vst [vmem:[%s206 + $0x148] sm:$0xff] %v766
        %972 = vst [vmem:[%s206 + $0x150] sm:$0xff] %v770
        %973 = vst [vmem:[%s206 + $0x158] sm:$0xff] %v772
        %974 = vst [vmem:[%s206 + $0x160] sm:$0xff] %v776
        %975 = vst [vmem:[%s206 + $0x168] sm:$0xff] %v778
        %976 = vst [vmem:[%s206 + $0x170] sm:$0xff] %v782
        %977 = vst [vmem:[%s206 + $0x178] sm:$0xff] %v784
        %978 = vst [vmem:[%s206 + $0x180] sm:$0xff] %v788
        %979 = vst [vmem:[%s206 + $0x188] sm:$0xff] %v790
        %980 = vst [vmem:[%s206 + $0x190] sm:$0xff] %v794
        %981 = vst [vmem:[%s206 + $0x198] sm:$0xff] %v796
        %982 = vst [vmem:[%s206 + $0x1a0] sm:$0xff] %v800
        %983 = vst [vmem:[%s206 + $0x1a8] sm:$0xff] %v802
        %984 = vst [vmem:[%s206 + $0x1b0] sm:$0xff] %v806
        %985 = vst [vmem:[%s206 + $0x1b8] sm:$0xff] %v808
        %986 = vst [vmem:[%s206 + $0x1c0] sm:$0xff] %v812
        %987 = vst [vmem:[%s206 + $0x1c8] sm:$0xff] %v814
        %988 = vst [vmem:[%s206 + $0x1d0] sm:$0xff] %v818
        %989 = vst [vmem:[%s206 + $0x1d8] sm:$0xff] %v820
        %990 = vst [vmem:[%s206 + $0x1e0] sm:$0xff] %v824
        %991 = vst [vmem:[%s206 + $0x1e8] sm:$0xff] %v826
        %992 = vst [vmem:[%s206 + $0x1f0] sm:$0xff] %v830
        %993 = vst [vmem:[%s206 + $0x1f8] sm:$0xff] %v832
        %994 = vst [vmem:[%s206 + $0x200] sm:$0xff] %v836
        %995 = vst [vmem:[%s206 + $0x208] sm:$0xff] %v838
        %996 = vst [vmem:[%s206 + $0x210] sm:$0xff] %v842
        %997 = vst [vmem:[%s206 + $0x218] sm:$0xff] %v844
        %998 = vst [vmem:[%s206 + $0x220] sm:$0xff] %v848
        %999 = vst [vmem:[%s206 + $0x228] sm:$0xff] %v850
        %1000 = vst [vmem:[%s206 + $0x230] sm:$0xff] %v854
        %1001 = vst [vmem:[%s206 + $0x238] sm:$0xff] %v856
        %1002 = vst [vmem:[%s206 + $0x240] sm:$0xff] %v860
        %1003 = vst [vmem:[%s206 + $0x248] sm:$0xff] %v862
        %1004 = vst [vmem:[%s206 + $0x250] sm:$0xff] %v866
        %1005 = vst [vmem:[%s206 + $0x258] sm:$0xff] %v868
        %1006 = vst [vmem:[%s206 + $0x260] sm:$0xff] %v872
        %1007 = vst [vmem:[%s206 + $0x268] sm:$0xff] %v874
        %1008 = vst [vmem:[%s206 + $0x270] sm:$0xff] %v878
        %1009 = vst [vmem:[%s206 + $0x278] sm:$0xff] %v880
        %1010 = vst [vmem:[%s206 + $0x280] sm:$0xff] %v884
        %1011 = vst [vmem:[%s206 + $0x288] sm:$0xff] %v886
        %1012 = vst [vmem:[%s206 + $0x290] sm:$0xff] %v890
        %1013 = vst [vmem:[%s206 + $0x298] sm:$0xff] %v892
        %1014 = vst [vmem:[%s206 + $0x2a0] sm:$0xff] %v896
        %1015 = vst [vmem:[%s206 + $0x2a8] sm:$0xff] %v898
        %1016 = vst [vmem:[%s206 + $0x2b0] sm:$0xff] %v902
        %1017 = vst [vmem:[%s206 + $0x2b8] sm:$0xff] %v904
        %1018 = vst [vmem:[%s206 + $0x2c0] sm:$0xff] %v908
        %1019 = vst [vmem:[%s206 + $0x2c8] sm:$0xff] %v910
        %1020 = vst [vmem:[%s206 + $0x2d0] sm:$0xff] %v914
        %1021 = vst [vmem:[%s206 + $0x2d8] sm:$0xff] %v916
        %1022 = vst [vmem:[%s206 + $0x2e0] sm:$0xff] %v920
        %1023 = vst [vmem:[%s206 + $0x2e8] sm:$0xff] %v922
        %1024 = vst [vmem:[%s206 + $0x2f0] sm:$0xff] %v926
        %1025 = vst [vmem:[%s206 + $0x2f8] sm:$0xff] %v928
        %s1026 = sand.u32 %s112, 1
        %s1027 = scalar_lea.sflag [#allocation4], %s1026
        %s1028 = sand.u32 %s112, 1
        %s1029 = smul.addr %s1028, 768
        %s1030 = scalar_lea.vmem [#allocation5], %s1029
        // Predicated region
        $region37: #{tpu_custom_call.1} parent=31 // pred_check
          %p1031 = pneg %p122
        $region38: #{tpu_custom_call.1} parent=31 // pred_check_branch
          %1033 = sbr.rel (%p1031) target = $region40
        $region39: #{tpu_custom_call.1} parent=31 // pred_region
          %s1034 = smul.u32 2, %s25
          %s1036 = ssub.s32 12288, 12288
          %1037 = vsyncadd %s1027, %s1036
          %s1038 = smul.addr %s24, 96
          %s1039 = sadd.s32 %s1034, %s1038
          %s1040 = smul.addr %s1039, 128
          %s1041 = scalar_lea.hbm %s3, %s1040
          %s1042 = sshll.u32 %s1030, 4
          %s1043 = int_to_ptr.vmem [resolvable:$true] %s1042
          %1048 = dma.vmem_to_hbm [thread:$0]  %s1043, 12288, %s1041, %s1027, 256, 256, 16
        $region40: #{tpu_custom_call.1} parent=31 // pred_fallthru
          _
      $region32: #{tpu_custom_call.1} parent=5 // pred_fallthru
        _
      %p1049 = scmp.le.s32.totalorder 2, %s15
      // Predicated region
      $region41: #{tpu_custom_call.1} parent=5 // pred_check
        %p1050 = pneg %p1049
      $region42: #{tpu_custom_call.1} parent=5 // pred_check_branch
        %1052 = sbr.rel (%p1050) target = $region44
      $region43: #{tpu_custom_call.1} parent=5 // pred_region
        %s1053 = ssub.s32 %s15, 2
        // Predicated region
        $region45: #{tpu_custom_call.1} parent=43 // pred_check
          %p1054 = pneg %p128
        $region46: #{tpu_custom_call.1} parent=43 // pred_check_branch
          %1056 = sbr.rel (%p1054) target = $region48
        $region47: #{tpu_custom_call.1} parent=43 // pred_region
          %s1057 = sand.u32 %s113, 1
          %s1058 = scalar_lea.sflag [#allocation4], %s1057
          %s1059 = sand.u32 %s113, 1
          %s1060 = smul.addr %s1059, 768
          %s1061 = scalar_lea.vmem [#allocation5], %s1060
          %1062 = dma.done %s1058, 12288
        $region48: #{tpu_custom_call.1} parent=43 // pred_fallthru
          _
      $region44: #{tpu_custom_call.1} parent=5 // pred_fallthru
        _
    $region6: #{tpu_custom_call.1} parent=1 // loop_footer
      %s19 = sadd.s32 1, %s15
    $region7: #{tpu_custom_call.1} parent=1 // loop_footer_branch
      %14 = sbr.rel target = $region3
    $region8: #{tpu_custom_call.1} parent=1 // loop_exit
      _
    %1063 = vsyncpa [#allocation3], 1
    %s1064 = scalar_lea.sflag [#allocation3], 1
    %1065 = vsyncpa %s1064, 1
    %1066 = vsyncpa [#allocation4], 1
    %s1067 = scalar_lea.sflag [#allocation4], 1
    %1068 = vsyncpa %s1067, 1

</llo_original>
